<compile_context>
chip_gen: v5e
topology: v5e:2x2
jax: 0.10.0
libtpu: 0.0.40
codegen_flags: <defaults>
</compile_context>

<pallas_src>
import jax
import jax.numpy as jnp
from jax import lax
from jax.experimental import pallas as pl
from jax.experimental.pallas import tpu as pltpu


def _ctg_kernel(x_ref, at_ref, w_ref, b_ref, o_ref):
    """One block of TB (n,t) rows, channels-last layout.

    x_ref : (TB, V, C_eff)   node features, channels on lanes
    at_ref: (TB, V, V)       A[n,t] transposed (at[b, w, v] == A[b, v, w])
    w_ref : (C_eff, C_out)   conv weight (transposed), grid-invariant
    b_ref : (1, C_out)       conv bias, grid-invariant
    o_ref : (TB, V, C_out)   output, channels on lanes
    """
    tb, v, c_eff = x_ref.shape
    c_out = w_ref.shape[1]

    # Pointwise-over-channels conv == one tall MXU GEMM (TB*V, C_eff) @ (C_eff, C_out).
    x2 = x_ref[...].reshape(tb * v, c_eff)
    y = jnp.dot(x2, w_ref[...], preferred_element_type=jnp.float32) + b_ref[...]
    y = y.reshape(tb, v, c_out)

    # Graph conv: out[b, w, c] = sum_v A[b, v, w] * y[b, v, c]
    # = canonical batched matmul of A^T (TB, W, V) with y (TB, V, C_out).
    o = lax.dot_general(
        at_ref[...], y,
        dimension_numbers=(((2,), (1,)), ((0,), (0,))),
        preferred_element_type=jnp.float32)
    o_ref[...] = o.astype(o_ref.dtype)


def _pick_block_rows(nt, v, c_eff, c_out, itemsize,
                     vmem_budget_bytes=20 * 1024 * 1024):
    """Largest TB dividing nt whose double-buffered tiles fit the VMEM budget (v7x-safe)."""
    per_row_bytes = (v * c_eff + v * v + v * c_out) * itemsize   # x + A + out per (n,t)
    max_tb = max(1, vmem_budget_bytes // (2 * per_row_bytes))    # 2x: double buffering
    max_tb = int(min(max_tb, nt, 1024))
    tb = 1
    for d in range(1, max_tb + 1):
        if nt % d == 0:
            tb = d
    # Prefer an even grid extent (v7x has 2 TensorCores) when the grid is tiny.
    if (nt // tb) % 2 == 1 and tb % 2 == 0 and (nt // tb) < 8:
        tb //= 2
    return tb


def conv_temporal_graphical(x, A, weight, bias, kernel_size,
                            t_stride=1, t_padding=0, t_dilation=1):
    """x: (N, C_in, T_in, V), A: (N, kernel_size, V, V), weight: (C_out, C_in, kt, 1)."""
    N, C_in, T_in, V = x.shape
    C_out, C_in_w, kt, kw = weight.shape
    assert kw == 1 and C_in_w == C_in
    assert A.shape[1] == kernel_size, "A.size(1) must equal kernel_size"

    # ---- temporal im2col so the conv becomes a single matmul (trivial for kt == 1) ----
    # TODO(synk): for kt > 1, the unfold could be folded into the BlockSpec index_map
    # (accumulating over taps in-kernel) to avoid the kt-x HBM blowup of im2col.
    if t_padding:
        x = jnp.pad(x, ((0, 0), (0, 0), (t_padding, t_padding), (0, 0)))
    T_pad = x.shape[2]
    T_out = (T_pad - t_dilation * (kt - 1) - 1) // t_stride + 1
    cols = [x[:, :, k * t_dilation: k * t_dilation + t_stride * (T_out - 1) + 1: t_stride, :]
            for k in range(kt)]
    x_unf = jnp.stack(cols, axis=2).reshape(N, C_in * kt, T_out, V)   # (N, C_eff, T_out, V)
    C_eff = C_in * kt

    assert A.shape == (N, T_out, V, V), "einsum requires A time dim == conv output T"

    # TODO(synk): self.drop (nn.Dropout) is the identity in eval mode; training-mode
    # stochastic dropout is not implemented here.

    # ---- channels-last kernel layout (lane-dense output, one big GEMM per block) ------
    NT = N * T_out
    x_k = jnp.transpose(x_unf, (0, 2, 3, 1)).reshape(NT, V, C_eff)    # (NT, V, C_eff)
    a_k = jnp.swapaxes(A, 2, 3).reshape(NT, V, V)                     # A^T per (n,t)
    w_t = weight.reshape(C_out, C_eff).T                              # (C_eff, C_out)
    b_k = bias.reshape(1, C_out)
    # NOTE: on v6e/v7x, casting x_k/a_k/w_t to bf16 (keeping f32 accumulation) halves
    # HBM traffic; kept f32 here to preserve the module's numerics exactly.

    itemsize = x_k.dtype.itemsize
    TB = _pick_block_rows(NT, V, C_eff, C_out, itemsize)
    grid = NT // TB

    flops = 2 * NT * V * C_out * (C_eff + V)
    bytes_accessed = itemsize * (NT * V * C_eff + NT * V * V + C_eff * C_out
                                 + C_out + NT * V * C_out)

    out = pl.pallas_call(
        _ctg_kernel,
        out_shape=jax.ShapeDtypeStruct((NT, V, C_out), x.dtype),
        grid_spec=pltpu.PrefetchScalarGridSpec(
            num_scalar_prefetch=0,
            grid=(grid,),
            in_specs=[
                pl.BlockSpec((TB, V, C_eff), lambda i: (i, 0, 0)),    # x rows
                pl.BlockSpec((TB, V, V), lambda i: (i, 0, 0)),        # A^T rows
                pl.BlockSpec((C_eff, C_out), lambda i: (0, 0)),       # weight (resident)
                pl.BlockSpec((1, C_out), lambda i: (0, 0)),           # bias (resident)
            ],
            out_specs=pl.BlockSpec((TB, V, C_out), lambda i: (i, 0, 0)),
        ),
        compiler_params=pltpu.CompilerParams(
            dimension_semantics=("parallel",),
            vmem_limit_bytes=32 * 1024 * 1024,
        ),
        cost_estimate=pl.CostEstimate(flops=int(flops), transcendentals=0,
                                      bytes_accessed=int(bytes_accessed)),
    )(x_k, a_k, w_t, b_k)

    out = out.reshape(N, T_out, V, C_out).transpose(0, 3, 1, 2)       # (N, C_out, T_out, V)
    return out, A


if __name__ == "__main__":
    # small shapes consistent with the module's forward:
    #   x: (N, C_in, T, V), A: (N, K, V, V) with K == kernel_size == T
    N, C_in, C_out, T, V = 2, 4, 8, 8, 16
    kernel_size = T

    key = jax.random.PRNGKey(0)
    kx, ka, kw, kb = jax.random.split(key, 4)
    x = jax.random.normal(kx, (N, C_in, T, V), dtype=jnp.float32)
    A = jax.random.normal(ka, (N, kernel_size, V, V), dtype=jnp.float32)

    # deterministic parameter init (Conv2d with kernel (1,1), bias=True)
    t_kernel_size = 1
    weight = 0.1 * jax.random.normal(kw, (C_out, C_in, t_kernel_size, 1), dtype=jnp.float32)
    bias = 0.1 * jax.random.normal(kb, (C_out,), dtype=jnp.float32)

    out, A_out = conv_temporal_graphical(x, A, weight, bias, kernel_size)
    out = jax.block_until_ready(out)

    # pure-JAX reference (conv 1x1 + einsum), dropout is identity in eval
    y_ref = jnp.einsum("oi,nitv->notv", weight.reshape(C_out, C_in), x) \
        + bias[None, :, None, None]
    ref = jnp.einsum("nctv,ntvw->nctw", y_ref, A)

    assert out.shape == (N, C_out, T, V)
    assert A_out.shape == A.shape
    assert jnp.allclose(out, ref, atol=2e-4, rtol=2e-4), "mismatch vs reference"
    print("KERNEL_OK")
</pallas_src>

<mosaic_0001>
module attributes {stable_mosaic.version = 11 : i64} {
  func.func @_ctg_kernel(%arg0: i32, %arg1: memref<8x16x4xf32, #tpu.memory_space<vmem>>, %arg2: memref<8x16x16xf32, #tpu.memory_space<vmem>>, %arg3: memref<4x8xf32, #tpu.memory_space<vmem>>, %arg4: memref<1x8xf32, #tpu.memory_space<vmem>>, %arg5: memref<8x16x8xf32, #tpu.memory_space<vmem>>) attributes {dimension_semantics = [#tpu.dimension_semantics<parallel>], iteration_bounds = array<i64: 2>, scalar_prefetch = 0 : i64, scratch_operands = 0 : i64, tpu.core_type = #tpu.core_type<tc>, window_params = [{transform_indices = @transform_0, window_bounds = array<i64: 8, 16, 4>}, {transform_indices = @transform_1, window_bounds = array<i64: 8, 16, 16>}, {pipeline_mode = #tpu.pipeline_mode<synchronous>, transform_indices = @transform_2, window_bounds = array<i64: 4, 8>}, {pipeline_mode = #tpu.pipeline_mode<synchronous>, transform_indices = @transform_3, window_bounds = array<i64: 1, 8>}, {transform_indices = @transform_4, window_bounds = array<i64: 8, 16, 8>}]} {
    %c0 = arith.constant 0 : index
    %c0_0 = arith.constant 0 : index
    %c0_1 = arith.constant 0 : index
    %0 = vector.load %arg1[%c0, %c0_0, %c0_1] : memref<8x16x4xf32, #tpu.memory_space<vmem>>, vector<8x16x4xf32>
    %1 = vector.shape_cast %0 : vector<8x16x4xf32> to vector<128x4xf32>
    %c0_2 = arith.constant 0 : index
    %c0_3 = arith.constant 0 : index
    %2 = vector.load %arg3[%c0_2, %c0_3] : memref<4x8xf32, #tpu.memory_space<vmem>>, vector<4x8xf32>
    %cst = arith.constant dense<0.000000e+00> : vector<128x8xf32>
    %3 = tpu.matmul %1, %2, %cst {dimension_numbers = #tpu.dot_dimension_numbers<[1], [0], [0], [1], [0, 0, 1, 1], [], []>} : vector<128x4xf32>, vector<4x8xf32>, vector<128x8xf32> -> vector<128x8xf32>
    %c0_4 = arith.constant 0 : index
    %c0_5 = arith.constant 0 : index
    %4 = vector.load %arg4[%c0_4, %c0_5] : memref<1x8xf32, #tpu.memory_space<vmem>>, vector<1x8xf32>
    %5 = vector.broadcast %4 : vector<1x8xf32> to vector<128x8xf32>
    %6 = arith.addf %3, %5 : vector<128x8xf32>
    %7 = vector.shape_cast %6 : vector<128x8xf32> to vector<8x16x8xf32>
    %c0_6 = arith.constant 0 : index
    %c0_7 = arith.constant 0 : index
    %c0_8 = arith.constant 0 : index
    %8 = vector.load %arg2[%c0_6, %c0_7, %c0_8] : memref<8x16x16xf32, #tpu.memory_space<vmem>>, vector<8x16x16xf32>
    %cst_9 = arith.constant dense<0.000000e+00> : vector<8x16x8xf32>
    %9 = tpu.matmul %8, %7, %cst_9 {dimension_numbers = #tpu.dot_dimension_numbers<[2], [1], [1], [2], [0, 0, 0, 1, 1, 2], [0], [0]>} : vector<8x16x16xf32>, vector<8x16x8xf32>, vector<8x16x8xf32> -> vector<8x16x8xf32>
    %c0_10 = arith.constant 0 : index
    %c0_11 = arith.constant 0 : index
    %c0_12 = arith.constant 0 : index
    %10 = vector.load %arg5[%c0_10, %c0_11, %c0_12] : memref<8x16x8xf32, #tpu.memory_space<vmem>>, vector<8x16x8xf32>
    tpu.vector_store %arg5[%c0_10, %c0_11, %c0_12], %9 {strides = array<i32>} : memref<8x16x8xf32, #tpu.memory_space<vmem>>, vector<8x16x8xf32>,
    return
  }
  func.func @transform_0(%arg0: i32) -> (i32, i32, i32) {
    %c0_i32 = arith.constant 0 : i32
    %c0_i32_0 = arith.constant 0 : i32
    %c0_i32_1 = arith.constant 0 : i32
    return %arg0, %c0_i32, %c0_i32_0 : i32, i32, i32
  }
  func.func @transform_1(%arg0: i32) -> (i32, i32, i32) {
    %c0_i32 = arith.constant 0 : i32
    %c0_i32_0 = arith.constant 0 : i32
    %c0_i32_1 = arith.constant 0 : i32
    return %arg0, %c0_i32, %c0_i32_0 : i32, i32, i32
  }
  func.func @transform_2(%arg0: i32) -> (i32, i32) {
    %c0_i32 = arith.constant 0 : i32
    %c0_i32_0 = arith.constant 0 : i32
    %c0_i32_1 = arith.constant 0 : i32
    return %c0_i32, %c0_i32_0 : i32, i32
  }
  func.func @transform_3(%arg0: i32) -> (i32, i32) {
    %c0_i32 = arith.constant 0 : i32
    %c0_i32_0 = arith.constant 0 : i32
    %c0_i32_1 = arith.constant 0 : i32
    return %c0_i32, %c0_i32_0 : i32, i32
  }
  func.func @transform_4(%arg0: i32) -> (i32, i32, i32) {
    %c0_i32 = arith.constant 0 : i32
    %c0_i32_0 = arith.constant 0 : i32
    %c0_i32_1 = arith.constant 0 : i32
    return %arg0, %c0_i32, %c0_i32_0 : i32, i32, i32
  }
}

</mosaic_0001>

<llo_original>
// kernel: tpu_custom_call.1
$region0: #{tpu_custom_call.1}
  #allocation0 [shape = 'u32[]', space=smem, size = 0x4, offset = 0x4, fixed_abs, tag = 'smem constant byte address 0x4 - core index']
  #allocation1 [shape = 'u32[72,128]{1,0:T(1,128)}', space=vmem, size = 0x9000, scoped, tag = 'internal scratch']
  %s0 = inlined_call_operand.vmem [shape: f32[16,16,4], index: 0, kind: input, shape index: {}]
  %s1 = inlined_call_operand.vmem [shape: f32[16,16,16], index: 1, kind: input, shape index: {}]
  %s2 = inlined_call_operand.vmem [shape: f32[4,8], index: 2, kind: input, shape index: {}]
  %s3 = inlined_call_operand.vmem [shape: f32[1,8], index: 3, kind: input, shape index: {}]
  %s4 = inlined_call_operand.vmem [shape: f32[16,16,8], index: 4, kind: output, shape index: {}]
  %s5 = sld [smem:[#allocation0]]
  $region49: #{tpu_custom_call.1} parent=0
    _
  %s7 = ssub.s32 1, %s5
  %s8 = scalar_select 0, %s7, %s5
  loop: start=0, step=1, limit=4
  $region2: #{tpu_custom_call.1} parent=0 // loop_pre_header
    _
  $region3: #{tpu_custom_call.1} parent=0 // loop_header
    %s10 = sphi 0, %s14
    %p11 = scmp.ge.s32.totalorder %s10, 4
    %s20 = sphi 0, %s22
    %s23 = sphi 0, %s20
    %s24 = sphi 0, %s23
    %s40 = sphi 0, %s24
    %s46 = sphi 0, %s48
    %s49 = sphi 0, %s46
    %s50 = sphi 0, %s49
    %s66 = sphi 0, %s50
    %s70 = sphi 0, %s70
    %s72 = sphi 0, %s70
    %s73 = sphi 0, %s72
    %s87 = sphi 0, %s73
    %s91 = sphi 0, %s91
    %s93 = sphi 0, %s91
    %s94 = sphi 0, %s93
    %s108 = sphi 0, %s94
    %s114 = sphi 0, %s116
    %s117 = sphi 0, %s114
    %s118 = sphi 0, %s117
    %s134 = sphi 0, %s118
  $region4: #{tpu_custom_call.1} parent=0 // loop_header_branch
    %13 = sbr.rel (%p11) target = $region8
  $region5: #{tpu_custom_call.1} parent=0 // loop_body
    %s15 = ssub.s32 %s10, 1
    %s16 = ssub.s32 %s10, 2
    %s17 = sadd.s32 %s10, 1
    %s18 = ssub.s32 %s10, %s17
    %p19 = scmp.eq.s32.totalorder %s18, 0
    %s21 = sadd.s32 %s20, 1
    %s22 = scalar_select %p19, %s20, %s21
    %p25 = pneg %p19
    %p26 = scmp.eq.s32.totalorder %s10, 1
    %p27 = por %p25, %p26
    %p28 = scmp.ne.s32.totalorder %s20, %s23
    %p29 = scmp.eq.s32.totalorder %s10, 0
    %p30 = por %p28, %p29
    %p31 = scmp.ne.s32.totalorder %s20, %s23
    %p32 = scmp.eq.s32.totalorder %s15, 1
    %p33 = por %p31, %p32
    %p34 = scmp.ne.s32.totalorder %s23, %s24
    %p35 = scmp.eq.s32.totalorder %s15, 0
    %p36 = por %p34, %p35
    %p37 = scmp.ne.s32.totalorder %s23, %s24
    %p38 = scmp.eq.s32.totalorder %s16, 1
    %p39 = por %p37, %p38
    %p41 = scmp.ne.s32.totalorder %s24, %s40
    %p42 = scmp.eq.s32.totalorder %s16, 0
    %p43 = por %p41, %p42
    %s44 = ssub.s32 %s10, %s17
    %p45 = scmp.eq.s32.totalorder %s44, 0
    %s47 = sadd.s32 %s46, 1
    %s48 = scalar_select %p45, %s46, %s47
    %p51 = pneg %p45
    %p52 = scmp.eq.s32.totalorder %s10, 1
    %p53 = por %p51, %p52
    %p54 = scmp.ne.s32.totalorder %s46, %s49
    %p55 = scmp.eq.s32.totalorder %s10, 0
    %p56 = por %p54, %p55
    %p57 = scmp.ne.s32.totalorder %s46, %s49
    %p58 = scmp.eq.s32.totalorder %s15, 1
    %p59 = por %p57, %p58
    %p60 = scmp.ne.s32.totalorder %s49, %s50
    %p61 = scmp.eq.s32.totalorder %s15, 0
    %p62 = por %p60, %p61
    %p63 = scmp.ne.s32.totalorder %s49, %s50
    %p64 = scmp.eq.s32.totalorder %s16, 1
    %p65 = por %p63, %p64
    %p67 = scmp.ne.s32.totalorder %s50, %s66
    %p68 = scmp.eq.s32.totalorder %s16, 0
    %p69 = por %p67, %p68
    %s71 = sadd.s32 %s70, 1
    %p74 = scmp.eq.s32.totalorder %s10, 1
    %p75 = scmp.ne.s32.totalorder %s70, %s72
    %p76 = scmp.eq.s32.totalorder %s10, 0
    %p77 = por %p75, %p76
    %p78 = scmp.ne.s32.totalorder %s70, %s72
    %p79 = scmp.eq.s32.totalorder %s15, 1
    %p80 = por %p78, %p79
    %p81 = scmp.ne.s32.totalorder %s72, %s73
    %p82 = scmp.eq.s32.totalorder %s15, 0
    %p83 = por %p81, %p82
    %p84 = scmp.ne.s32.totalorder %s72, %s73
    %p85 = scmp.eq.s32.totalorder %s16, 1
    %p86 = por %p84, %p85
    %p88 = scmp.ne.s32.totalorder %s73, %s87
    %p89 = scmp.eq.s32.totalorder %s16, 0
    %p90 = por %p88, %p89
    %s92 = sadd.s32 %s91, 1
    %p95 = scmp.eq.s32.totalorder %s10, 1
    %p96 = scmp.ne.s32.totalorder %s91, %s93
    %p97 = scmp.eq.s32.totalorder %s10, 0
    %p98 = por %p96, %p97
    %p99 = scmp.ne.s32.totalorder %s91, %s93
    %p100 = scmp.eq.s32.totalorder %s15, 1
    %p101 = por %p99, %p100
    %p102 = scmp.ne.s32.totalorder %s93, %s94
    %p103 = scmp.eq.s32.totalorder %s15, 0
    %p104 = por %p102, %p103
    %p105 = scmp.ne.s32.totalorder %s93, %s94
    %p106 = scmp.eq.s32.totalorder %s16, 1
    %p107 = por %p105, %p106
    %p109 = scmp.ne.s32.totalorder %s94, %s108
    %p110 = scmp.eq.s32.totalorder %s16, 0
    %p111 = por %p109, %p110
    %s112 = ssub.s32 %s10, %s17
    %p113 = scmp.eq.s32.totalorder %s112, 0
    %s115 = sadd.s32 %s114, 1
    %s116 = scalar_select %p113, %s114, %s115
    %p119 = pneg %p113
    %p120 = scmp.eq.s32.totalorder %s10, 1
    %p121 = por %p119, %p120
    %p122 = scmp.ne.s32.totalorder %s114, %s117
    %p123 = scmp.eq.s32.totalorder %s10, 0
    %p124 = por %p122, %p123
    %p125 = scmp.ne.s32.totalorder %s114, %s117
    %p126 = scmp.eq.s32.totalorder %s15, 1
    %p127 = por %p125, %p126
    %p128 = scmp.ne.s32.totalorder %s117, %s118
    %p129 = scmp.eq.s32.totalorder %s15, 0
    %p130 = por %p128, %p129
    %p131 = scmp.ne.s32.totalorder %s117, %s118
    %p132 = scmp.eq.s32.totalorder %s16, 1
    %p133 = por %p131, %p132
    %p135 = scmp.ne.s32.totalorder %s118, %s134
    %p136 = scmp.eq.s32.totalorder %s16, 0
    %p137 = por %p135, %p136
    %p138 = scmp.le.s32.totalorder 1, %s10
    %p139 = scmp.lt.s32.totalorder %s10, 3
    %p140 = pnand %p138, %p139
    %p141 = pneg %p140
    // Predicated region
    $region9: #{tpu_custom_call.1} parent=5 // pred_check
      _
    $region10: #{tpu_custom_call.1} parent=5 // pred_check_branch
      %143 = sbr.rel (%p140) target = $region12
    $region11: #{tpu_custom_call.1} parent=5 // pred_region
      %s144 = ssub.s32 %s10, 1
      // Predicated region
      $region13: #{tpu_custom_call.1} parent=11 // pred_check
        %p145 = pneg %p83
      $region14: #{tpu_custom_call.1} parent=11 // pred_check_branch
        %147 = sbr.rel (%p145) target = $region16
      $region15: #{tpu_custom_call.1} parent=11 // pred_region
        _
      $region16: #{tpu_custom_call.1} parent=11 // pred_fallthru
        _
      // Predicated region
      $region17: #{tpu_custom_call.1} parent=11 // pred_check
        %p148 = pneg %p104
      $region18: #{tpu_custom_call.1} parent=11 // pred_check_branch
        %150 = sbr.rel (%p148) target = $region20
      $region19: #{tpu_custom_call.1} parent=11 // pred_region
        _
      $region20: #{tpu_custom_call.1} parent=11 // pred_fallthru
        _
    $region12: #{tpu_custom_call.1} parent=5 // pred_fallthru
      _
    %p151 = scmp.lt.s32.totalorder %s10, 2
    // Predicated region
    $region21: #{tpu_custom_call.1} parent=5 // pred_check
      %p152 = pneg %p151
    $region22: #{tpu_custom_call.1} parent=5 // pred_check_branch
      %154 = sbr.rel (%p152) target = $region24
    $region23: #{tpu_custom_call.1} parent=5 // pred_region
      // Predicated region
      $region25: #{tpu_custom_call.1} parent=23 // pred_check
        %p155 = pneg %p30
      $region26: #{tpu_custom_call.1} parent=23 // pred_check_branch
        %157 = sbr.rel (%p155) target = $region28
      $region27: #{tpu_custom_call.1} parent=23 // pred_region
        %s158 = smul.u32 8, %s10
        %p159 = scmp.lt.s32.totalorder %s158, 15
        %s160 = scalar_select %p159, %s158, 15
        %s161 = smul.addr %s160, 2
        %s162 = smul.addr %s161, 8
        %s163 = scalar_lea.vmem %s0, %s162
        %s164 = smul.u32 8, %s10
      $region28: #{tpu_custom_call.1} parent=23 // pred_fallthru
        _
      // Predicated region
      $region29: #{tpu_custom_call.1} parent=23 // pred_check
        %p165 = pneg %p56
      $region30: #{tpu_custom_call.1} parent=23 // pred_check_branch
        %167 = sbr.rel (%p165) target = $region32
      $region31: #{tpu_custom_call.1} parent=23 // pred_region
        %s168 = smul.u32 8, %s10
        %p169 = scmp.lt.s32.totalorder %s168, 15
        %s170 = scalar_select %p169, %s168, 15
        %s171 = smul.addr %s170, 2
        %s172 = smul.addr %s171, 8
        %s173 = scalar_lea.vmem %s1, %s172
        %s174 = smul.u32 8, %s10
      $region32: #{tpu_custom_call.1} parent=23 // pred_fallthru
        _
    $region24: #{tpu_custom_call.1} parent=5 // pred_fallthru
      _
    %p175 = scmp.le.s32.totalorder 1, %s10
    %p176 = scmp.lt.s32.totalorder %s10, 3
    %p177 = pnand %p175, %p176
    %p178 = pneg %p177
    // Predicated region
    $region33: #{tpu_custom_call.1} parent=5 // pred_check
      _
    $region34: #{tpu_custom_call.1} parent=5 // pred_check_branch
      %180 = sbr.rel (%p177) target = $region36
    $region35: #{tpu_custom_call.1} parent=5 // pred_region
      %s181 = ssub.s32 %s10, 1
      %s182 = smul.u32 8, %s15
      %p183 = scmp.lt.s32.totalorder %s182, 15
      %s184 = scalar_select %p183, %s182, 15
      %s185 = smul.addr %s184, 2
      %s186 = smul.addr %s185, 8
      %s187 = scalar_lea.vmem %s0, %s186
      %p188 = pneg %p36
      %p189 = pneg %p33
      %s190 = smul.u32 8, %s15
      %p191 = scmp.lt.s32.totalorder %s190, 15
      %s192 = scalar_select %p191, %s190, 15
      %s193 = smul.addr %s192, 2
      %s194 = smul.addr %s193, 8
      %s195 = scalar_lea.vmem %s1, %s194
      %p196 = pneg %p62
      %p197 = pneg %p59
      %p198 = pneg %p83
      %p199 = pneg %p80
      %p200 = pneg %p104
      %p201 = pneg %p101
      %p202 = pneg %p130
      %p203 = pneg %p127
      %s204 = smul.u32 8, %s15
      %p205 = scmp.lt.s32.totalorder %s204, 15
      %s206 = scalar_select %p205, %s204, 15
      %s207 = smul.addr %s206, 2
      %s208 = smul.addr %s207, 8
      %s209 = scalar_lea.vmem %s4, %s208
      %s210 = smul.u32 8, %s15
      %p211 = scmp.lt.s32.totalorder %s210, 15
      %s212 = scalar_select %p211, %s210, 15
      %s213 = smul.addr %s212, 2
      %s214 = smul.addr %s213, 8
      %s215 = scalar_lea.vmem %s0, %s214
      %s216 = smul.u32 8, %s15
      %s217 = smul.u32 8, %s15
      %p218 = scmp.lt.s32.totalorder %s217, 15
      %s219 = scalar_select %p218, %s217, 15
      %s220 = smul.addr %s219, 2
      %s221 = smul.addr %s220, 8
      %s222 = scalar_lea.vmem %s1, %s221
      %s223 = smul.u32 8, %s15
      %s224 = smul.u32 8, %s15
      %p225 = scmp.lt.s32.totalorder %s224, 15
      %s226 = scalar_select %p225, %s224, 15
      %s227 = smul.addr %s226, 2
      %s228 = smul.addr %s227, 8
      %s229 = scalar_lea.vmem %s4, %s228
      %s230 = smul.u32 8, %s15
      %v231 = vld [vmem:[%s215] sm:$0xff]
      %v232 = vld [vmem:[%s215 + $0x8] sm:$0xff]
      %v233 = vld [vmem:[%s215 + $0x10] sm:$0xff]
      %v234 = vld [vmem:[%s215 + $0x18] sm:$0xff]
      %v235 = vld [vmem:[%s215 + $0x20] sm:$0xff]
      %v236 = vld [vmem:[%s215 + $0x28] sm:$0xff]
      %v237 = vld [vmem:[%s215 + $0x30] sm:$0xff]
      %v238 = vld [vmem:[%s215 + $0x38] sm:$0xff]
      %v239 = vld [vmem:[%s215 + $0x40] sm:$0xff]
      %v240 = vld [vmem:[%s215 + $0x48] sm:$0xff]
      %v241 = vld [vmem:[%s215 + $0x50] sm:$0xff]
      %v242 = vld [vmem:[%s215 + $0x58] sm:$0xff]
      %v243 = vld [vmem:[%s215 + $0x60] sm:$0xff]
      %v244 = vld [vmem:[%s215 + $0x68] sm:$0xff]
      %v245 = vld [vmem:[%s215 + $0x70] sm:$0xff]
      %v246 = vld [vmem:[%s215 + $0x78] sm:$0xff]
      %v247 = vld [vmem:[%s2] sm:$0xf]
      %v248 = vld [vmem:[%s3] sm:$0x1]
      %v250 = vperm.slane %v248, 0
      %vm252 = vcmask 31744
      %v254 = vsel %vm252, %v231, 0
      %v257 = vsel %vm252, %v232, 0
      %v260 = vsel %vm252, %v233, 0
      %v263 = vsel %vm252, %v234, 0
      %v266 = vsel %vm252, %v235, 0
      %v269 = vsel %vm252, %v236, 0
      %v272 = vsel %vm252, %v237, 0
      %v275 = vsel %vm252, %v238, 0
      %v278 = vsel %vm252, %v239, 0
      %v281 = vsel %vm252, %v240, 0
      %v284 = vsel %vm252, %v241, 0
      %v287 = vsel %vm252, %v242, 0
      %v290 = vsel %vm252, %v243, 0
      %v293 = vsel %vm252, %v244, 0
      %v296 = vsel %vm252, %v245, 0
      %v299 = vsel %vm252, %v246, 0
      %vm301 = vcmask 1043456
      %v303 = vsel %vm301, %v247, 0
      %305 = vmatpush.msra.mxu0 0.0
      %306 = vmatpush.msra.mxu0 0.0
      %307 = vmatpush.msra.mxu0 0.0
      %308 = vmatpush.msra.mxu0 0.0
      %309 = vmatpush.msra.mxu0 0.0
      %310 = vmatpush.msra.mxu0 0.0
      %311 = vmatpush.msra.mxu0 0.0
      %312 = vmatpush.msra.mxu0 0.0
      %313 = vmatpush.msra.mxu0 0.0
      %314 = vmatpush.msra.mxu0 0.0
      %315 = vmatpush.msra.mxu0 0.0
      %316 = vmatpush.msra.mxu0 0.0
      %317 = vmatpush.msra.mxu0 0.0
      %318 = vmatpush.msra.mxu0 0.0
      %319 = vmatpush.msra.mxu0 0.0
      %320 = vmatpush.msra.mxu0 %v303
      %321 = vmatmul.f32.gmra.mxu0 %v254
      %v322 = vpop.f32.mrf.mxu0
      %v323 = vadd.f32 %v250, %v322
      %324 = vmatmul.f32.gmra.mxu0 %v257
      %v325 = vpop.f32.mrf.mxu0
      %v326 = vadd.f32 %v250, %v325
      %327 = vmatmul.f32.gmra.mxu0 %v260
      %v328 = vpop.f32.mrf.mxu0
      %v329 = vadd.f32 %v250, %v328
      %330 = vmatmul.f32.gmra.mxu0 %v263
      %v331 = vpop.f32.mrf.mxu0
      %v332 = vadd.f32 %v250, %v331
      %333 = vmatmul.f32.gmra.mxu0 %v266
      %v334 = vpop.f32.mrf.mxu0
      %v335 = vadd.f32 %v250, %v334
      %336 = vmatmul.f32.gmra.mxu0 %v269
      %v337 = vpop.f32.mrf.mxu0
      %v338 = vadd.f32 %v250, %v337
      %339 = vmatmul.f32.gmra.mxu0 %v272
      %v340 = vpop.f32.mrf.mxu0
      %v341 = vadd.f32 %v250, %v340
      %342 = vmatmul.f32.gmra.mxu0 %v275
      %v343 = vpop.f32.mrf.mxu0
      %v344 = vadd.f32 %v250, %v343
      %345 = vmatmul.f32.gmra.mxu0 %v278
      %v346 = vpop.f32.mrf.mxu0
      %v347 = vadd.f32 %v250, %v346
      %348 = vmatmul.f32.gmra.mxu0 %v281
      %v349 = vpop.f32.mrf.mxu0
      %v350 = vadd.f32 %v250, %v349
      %351 = vmatmul.f32.gmra.mxu0 %v284
      %v352 = vpop.f32.mrf.mxu0
      %v353 = vadd.f32 %v250, %v352
      %354 = vmatmul.f32.gmra.mxu0 %v287
      %v355 = vpop.f32.mrf.mxu0
      %v356 = vadd.f32 %v250, %v355
      %357 = vmatmul.f32.gmra.mxu0 %v290
      %v358 = vpop.f32.mrf.mxu0
      %v359 = vadd.f32 %v250, %v358
      %360 = vmatmul.f32.gmra.mxu0 %v293
      %v361 = vpop.f32.mrf.mxu0
      %v362 = vadd.f32 %v250, %v361
      %363 = vmatmul.f32.gmra.mxu0 %v296
      %v364 = vpop.f32.mrf.mxu0
      %v365 = vadd.f32 %v250, %v364
      %366 = vmatmul.f32.gmra.mxu0 %v299
      %v367 = vpop.f32.mrf.mxu0
      %v368 = vadd.f32 %v250, %v367
      %369 = vdwg.mxu0
      %v370 = vld [vmem:[%s222] sm:$0xff]
      %v371 = vld [vmem:[%s222 + $0x8] sm:$0xff]
      %v372 = vld [vmem:[%s222 + $0x10] sm:$0xff]
      %v373 = vld [vmem:[%s222 + $0x18] sm:$0xff]
      %v374 = vld [vmem:[%s222 + $0x20] sm:$0xff]
      %v375 = vld [vmem:[%s222 + $0x28] sm:$0xff]
      %v376 = vld [vmem:[%s222 + $0x30] sm:$0xff]
      %v377 = vld [vmem:[%s222 + $0x38] sm:$0xff]
      %v378 = vld [vmem:[%s222 + $0x40] sm:$0xff]
      %v379 = vld [vmem:[%s222 + $0x48] sm:$0xff]
      %v380 = vld [vmem:[%s222 + $0x50] sm:$0xff]
      %v381 = vld [vmem:[%s222 + $0x58] sm:$0xff]
      %v382 = vld [vmem:[%s222 + $0x60] sm:$0xff]
      %v383 = vld [vmem:[%s222 + $0x68] sm:$0xff]
      %v384 = vld [vmem:[%s222 + $0x70] sm:$0xff]
      %v385 = vld [vmem:[%s222 + $0x78] sm:$0xff]
      %vm386 = vcmask 130048
      %v388 = vsel %vm386, %v370, 0
      %v391 = vsel %vm386, %v371, 0
      %393 = vmatpush.msra.mxu0 0.0
      %394 = vmatpush.msra.mxu0 0.0
      %395 = vmatpush.msra.mxu0 0.0
      %396 = vmatpush.msra.mxu0 0.0
      %397 = vmatpush.msra.mxu0 0.0
      %398 = vmatpush.msra.mxu0 0.0
      %399 = vmatpush.msra.mxu0 0.0
      %400 = vmatpush.msra.mxu0 0.0
      %401 = vmatpush.msra.mxu0 0.0
      %402 = vmatpush.msra.mxu0 0.0
      %403 = vmatpush.msra.mxu0 0.0
      %404 = vmatpush.msra.mxu0 0.0
      %405 = vmatpush.msra.mxu0 0.0
      %406 = vmatpush.msra.mxu0 0.0
      %407 = vmatpush.msra.mxu0 %v326
      %408 = vmatpush.msra.mxu0 %v323
      %409 = vmatmul.f32.gmra.mxu0 %v388
      %v410 = vpop.f32.mrf.mxu0
      %v411 = vadd.f32 0.0, %v410
      %412 = vmatmul.f32.gmra.mxu0 %v391
      %v413 = vpop.f32.mrf.mxu0
      %v414 = vadd.f32 0.0, %v413
      %415 = vdwg.mxu0
      %v417 = vsel %vm386, %v372, 0
      %v420 = vsel %vm386, %v373, 0
      %422 = vmatpush.msra.mxu0 0.0
      %423 = vmatpush.msra.mxu0 0.0
      %424 = vmatpush.msra.mxu0 0.0
      %425 = vmatpush.msra.mxu0 0.0
      %426 = vmatpush.msra.mxu0 0.0
      %427 = vmatpush.msra.mxu0 0.0
      %428 = vmatpush.msra.mxu0 0.0
      %429 = vmatpush.msra.mxu0 0.0
      %430 = vmatpush.msra.mxu0 0.0
      %431 = vmatpush.msra.mxu0 0.0
      %432 = vmatpush.msra.mxu0 0.0
      %433 = vmatpush.msra.mxu0 0.0
      %434 = vmatpush.msra.mxu0 0.0
      %435 = vmatpush.msra.mxu0 0.0
      %436 = vmatpush.msra.mxu0 %v332
      %437 = vmatpush.msra.mxu0 %v329
      %438 = vmatmul.f32.gmra.mxu0 %v417
      %v439 = vpop.f32.mrf.mxu0
      %v440 = vadd.f32 0.0, %v439
      %441 = vmatmul.f32.gmra.mxu0 %v420
      %v442 = vpop.f32.mrf.mxu0
      %v443 = vadd.f32 0.0, %v442
      %444 = vdwg.mxu0
      %v446 = vsel %vm386, %v374, 0
      %v449 = vsel %vm386, %v375, 0
      %451 = vmatpush.msra.mxu0 0.0
      %452 = vmatpush.msra.mxu0 0.0
      %453 = vmatpush.msra.mxu0 0.0
      %454 = vmatpush.msra.mxu0 0.0
      %455 = vmatpush.msra.mxu0 0.0
      %456 = vmatpush.msra.mxu0 0.0
      %457 = vmatpush.msra.mxu0 0.0
      %458 = vmatpush.msra.mxu0 0.0
      %459 = vmatpush.msra.mxu0 0.0
      %460 = vmatpush.msra.mxu0 0.0
      %461 = vmatpush.msra.mxu0 0.0
      %462 = vmatpush.msra.mxu0 0.0
      %463 = vmatpush.msra.mxu0 0.0
      %464 = vmatpush.msra.mxu0 0.0
      %465 = vmatpush.msra.mxu0 %v338
      %466 = vmatpush.msra.mxu0 %v335
      %467 = vmatmul.f32.gmra.mxu0 %v446
      %v468 = vpop.f32.mrf.mxu0
      %v469 = vadd.f32 0.0, %v468
      %470 = vmatmul.f32.gmra.mxu0 %v449
      %v471 = vpop.f32.mrf.mxu0
      %v472 = vadd.f32 0.0, %v471
      %473 = vdwg.mxu0
      %v475 = vsel %vm386, %v376, 0
      %v478 = vsel %vm386, %v377, 0
      %480 = vmatpush.msra.mxu0 0.0
      %481 = vmatpush.msra.mxu0 0.0
      %482 = vmatpush.msra.mxu0 0.0
      %483 = vmatpush.msra.mxu0 0.0
      %484 = vmatpush.msra.mxu0 0.0
      %485 = vmatpush.msra.mxu0 0.0
      %486 = vmatpush.msra.mxu0 0.0
      %487 = vmatpush.msra.mxu0 0.0
      %488 = vmatpush.msra.mxu0 0.0
      %489 = vmatpush.msra.mxu0 0.0
      %490 = vmatpush.msra.mxu0 0.0
      %491 = vmatpush.msra.mxu0 0.0
      %492 = vmatpush.msra.mxu0 0.0
      %493 = vmatpush.msra.mxu0 0.0
      %494 = vmatpush.msra.mxu0 %v344
      %495 = vmatpush.msra.mxu0 %v341
      %496 = vmatmul.f32.gmra.mxu0 %v475
      %v497 = vpop.f32.mrf.mxu0
      %v498 = vadd.f32 0.0, %v497
      %499 = vmatmul.f32.gmra.mxu0 %v478
      %v500 = vpop.f32.mrf.mxu0
      %v501 = vadd.f32 0.0, %v500
      %502 = vdwg.mxu0
      %v504 = vsel %vm386, %v378, 0
      %v507 = vsel %vm386, %v379, 0
      %509 = vmatpush.msra.mxu0 0.0
      %510 = vmatpush.msra.mxu0 0.0
      %511 = vmatpush.msra.mxu0 0.0
      %512 = vmatpush.msra.mxu0 0.0
      %513 = vmatpush.msra.mxu0 0.0
      %514 = vmatpush.msra.mxu0 0.0
      %515 = vmatpush.msra.mxu0 0.0
      %516 = vmatpush.msra.mxu0 0.0
      %517 = vmatpush.msra.mxu0 0.0
      %518 = vmatpush.msra.mxu0 0.0
      %519 = vmatpush.msra.mxu0 0.0
      %520 = vmatpush.msra.mxu0 0.0
      %521 = vmatpush.msra.mxu0 0.0
      %522 = vmatpush.msra.mxu0 0.0
      %523 = vmatpush.msra.mxu0 %v350
      %524 = vmatpush.msra.mxu0 %v347
      %525 = vmatmul.f32.gmra.mxu0 %v504
      %v526 = vpop.f32.mrf.mxu0
      %v527 = vadd.f32 0.0, %v526
      %528 = vmatmul.f32.gmra.mxu0 %v507
      %v529 = vpop.f32.mrf.mxu0
      %v530 = vadd.f32 0.0, %v529
      %531 = vdwg.mxu0
      %v533 = vsel %vm386, %v380, 0
      %v536 = vsel %vm386, %v381, 0
      %538 = vmatpush.msra.mxu0 0.0
      %539 = vmatpush.msra.mxu0 0.0
      %540 = vmatpush.msra.mxu0 0.0
      %541 = vmatpush.msra.mxu0 0.0
      %542 = vmatpush.msra.mxu0 0.0
      %543 = vmatpush.msra.mxu0 0.0
      %544 = vmatpush.msra.mxu0 0.0
      %545 = vmatpush.msra.mxu0 0.0
      %546 = vmatpush.msra.mxu0 0.0
      %547 = vmatpush.msra.mxu0 0.0
      %548 = vmatpush.msra.mxu0 0.0
      %549 = vmatpush.msra.mxu0 0.0
      %550 = vmatpush.msra.mxu0 0.0
      %551 = vmatpush.msra.mxu0 0.0
      %552 = vmatpush.msra.mxu0 %v356
      %553 = vmatpush.msra.mxu0 %v353
      %554 = vmatmul.f32.gmra.mxu0 %v533
      %v555 = vpop.f32.mrf.mxu0
      %v556 = vadd.f32 0.0, %v555
      %557 = vmatmul.f32.gmra.mxu0 %v536
      %v558 = vpop.f32.mrf.mxu0
      %v559 = vadd.f32 0.0, %v558
      %560 = vdwg.mxu0
      %v562 = vsel %vm386, %v382, 0
      %v565 = vsel %vm386, %v383, 0
      %567 = vmatpush.msra.mxu0 0.0
      %568 = vmatpush.msra.mxu0 0.0
      %569 = vmatpush.msra.mxu0 0.0
      %570 = vmatpush.msra.mxu0 0.0
      %571 = vmatpush.msra.mxu0 0.0
      %572 = vmatpush.msra.mxu0 0.0
      %573 = vmatpush.msra.mxu0 0.0
      %574 = vmatpush.msra.mxu0 0.0
      %575 = vmatpush.msra.mxu0 0.0
      %576 = vmatpush.msra.mxu0 0.0
      %577 = vmatpush.msra.mxu0 0.0
      %578 = vmatpush.msra.mxu0 0.0
      %579 = vmatpush.msra.mxu0 0.0
      %580 = vmatpush.msra.mxu0 0.0
      %581 = vmatpush.msra.mxu0 %v362
      %582 = vmatpush.msra.mxu0 %v359
      %583 = vmatmul.f32.gmra.mxu0 %v562
      %v584 = vpop.f32.mrf.mxu0
      %v585 = vadd.f32 0.0, %v584
      %586 = vmatmul.f32.gmra.mxu0 %v565
      %v587 = vpop.f32.mrf.mxu0
      %v588 = vadd.f32 0.0, %v587
      %589 = vdwg.mxu0
      %v591 = vsel %vm386, %v384, 0
      %v594 = vsel %vm386, %v385, 0
      %596 = vmatpush.msra.mxu0 0.0
      %597 = vmatpush.msra.mxu0 0.0
      %598 = vmatpush.msra.mxu0 0.0
      %599 = vmatpush.msra.mxu0 0.0
      %600 = vmatpush.msra.mxu0 0.0
      %601 = vmatpush.msra.mxu0 0.0
      %602 = vmatpush.msra.mxu0 0.0
      %603 = vmatpush.msra.mxu0 0.0
      %604 = vmatpush.msra.mxu0 0.0
      %605 = vmatpush.msra.mxu0 0.0
      %606 = vmatpush.msra.mxu0 0.0
      %607 = vmatpush.msra.mxu0 0.0
      %608 = vmatpush.msra.mxu0 0.0
      %609 = vmatpush.msra.mxu0 0.0
      %610 = vmatpush.msra.mxu0 %v368
      %611 = vmatpush.msra.mxu0 %v365
      %612 = vmatmul.f32.gmra.mxu0 %v591
      %v613 = vpop.f32.mrf.mxu0
      %v614 = vadd.f32 0.0, %v613
      %615 = vmatmul.f32.gmra.mxu0 %v594
      %v616 = vpop.f32.mrf.mxu0
      %v617 = vadd.f32 0.0, %v616
      %618 = vdwg.mxu0
      %vm619 = vcmask 64512
      %620 = vst.msk [vmem:[%s229] sm:$0xff] %vm619, %v411
      %621 = vst.msk [vmem:[%s229 + $0x8] sm:$0xff] %vm619, %v414
      %622 = vst.msk [vmem:[%s229 + $0x10] sm:$0xff] %vm619, %v440
      %623 = vst.msk [vmem:[%s229 + $0x18] sm:$0xff] %vm619, %v443
      %624 = vst.msk [vmem:[%s229 + $0x20] sm:$0xff] %vm619, %v469
      %625 = vst.msk [vmem:[%s229 + $0x28] sm:$0xff] %vm619, %v472
      %626 = vst.msk [vmem:[%s229 + $0x30] sm:$0xff] %vm619, %v498
      %627 = vst.msk [vmem:[%s229 + $0x38] sm:$0xff] %vm619, %v501
      %628 = vst.msk [vmem:[%s229 + $0x40] sm:$0xff] %vm619, %v527
      %629 = vst.msk [vmem:[%s229 + $0x48] sm:$0xff] %vm619, %v530
      %630 = vst.msk [vmem:[%s229 + $0x50] sm:$0xff] %vm619, %v556
      %631 = vst.msk [vmem:[%s229 + $0x58] sm:$0xff] %vm619, %v559
      %632 = vst.msk [vmem:[%s229 + $0x60] sm:$0xff] %vm619, %v585
      %633 = vst.msk [vmem:[%s229 + $0x68] sm:$0xff] %vm619, %v588
      %634 = vst.msk [vmem:[%s229 + $0x70] sm:$0xff] %vm619, %v614
      %635 = vst.msk [vmem:[%s229 + $0x78] sm:$0xff] %vm619, %v617
      %s636 = smul.u32 8, %s15
      %p637 = scmp.lt.s32.totalorder %s636, 15
      %s638 = scalar_select %p637, %s636, 15
      %s639 = smul.addr %s638, 2
      %s640 = smul.addr %s639, 8
      %s641 = scalar_lea.vmem %s4, %s640
      // Predicated region
      $region37: #{tpu_custom_call.1} parent=35 // pred_check
        %p642 = pneg %p127
      $region38: #{tpu_custom_call.1} parent=35 // pred_check_branch
        %644 = sbr.rel (%p642) target = $region40
      $region39: #{tpu_custom_call.1} parent=35 // pred_region
        %s645 = smul.u32 8, %s15
      $region40: #{tpu_custom_call.1} parent=35 // pred_fallthru
        _
    $region36: #{tpu_custom_call.1} parent=5 // pred_fallthru
      _
    %p646 = scmp.le.s32.totalorder 2, %s10
    // Predicated region
    $region41: #{tpu_custom_call.1} parent=5 // pred_check
      %p647 = pneg %p646
    $region42: #{tpu_custom_call.1} parent=5 // pred_check_branch
      %649 = sbr.rel (%p647) target = $region44
    $region43: #{tpu_custom_call.1} parent=5 // pred_region
      %s650 = ssub.s32 %s10, 2
      // Predicated region
      $region45: #{tpu_custom_call.1} parent=43 // pred_check
        %p651 = pneg %p133
      $region46: #{tpu_custom_call.1} parent=43 // pred_check_branch
        %653 = sbr.rel (%p651) target = $region48
      $region47: #{tpu_custom_call.1} parent=43 // pred_region
        %s654 = smul.u32 8, %s16
        %p655 = scmp.lt.s32.totalorder %s654, 15
        %s656 = scalar_select %p655, %s654, 15
        %s657 = smul.addr %s656, 2
        %s658 = smul.addr %s657, 8
        %s659 = scalar_lea.vmem %s4, %s658
      $region48: #{tpu_custom_call.1} parent=43 // pred_fallthru
        _
    $region44: #{tpu_custom_call.1} parent=5 // pred_fallthru
      _
  $region6: #{tpu_custom_call.1} parent=0 // loop_footer
    %s14 = sadd.s32 1, %s10
  $region7: #{tpu_custom_call.1} parent=0 // loop_footer_branch
    %9 = sbr.rel target = $region3
  $region8: #{tpu_custom_call.1} parent=0 // loop_exit
    _

</llo_original>
